<compile_context>
chip_gen: v7x
topology: tpu7x:2x2x1
jax: 0.10.0
libtpu: 0.0.40
codegen_flags: <defaults>
</compile_context>

<pallas_src>
import math

import jax
import jax.numpy as jnp
from jax.experimental import pallas as pl
from jax.experimental.pallas import tpu as pltpu

_LANE = 128


def _bias_add_kernel(x_ref, b_ref, o_ref):
    # x_ref: (TB, TN) tile of the flattened input
    # b_ref: (1, TN) bias tile (resident across the inner batch-tile axis)
    # o_ref: (TB, TN) output tile
    o_ref[...] = x_ref[...] + b_ref[...]  # implicit (1, TN) -> (TB, TN) broadcast


def _sublane_unit(itemsize: int) -> int:
    # Sub-32-bit dtypes pack along sublanes.
    return {4: 8, 2: 16, 1: 32}.get(itemsize, 8)


def _choose_tiles(B: int, N: int, itemsize: int) -> tuple[int, int]:
    """Pick (TB, TN) under a joint ~2 MiB per-block budget.

    TN (lane axis) is widened first, up to full N; TB (sublane axis) takes the
    remaining budget.  Both are kept aligned (128 / dtype-aware sublane unit)
    unless clamping to the full array dim (which is always a legal block).
    """
    lane = _LANE
    sub = _sublane_unit(itemsize)

    # 2 MiB blocks: double-buffered x + out ~8 MiB, plus resident bias, fits
    # the default scoped VMEM on every generation, and ensures >= 2 grid steps
    # (megacore-friendly) once the array exceeds ~2 MiB.
    block_budget_bytes = 2 * 1024 * 1024
    budget_elems = max(lane * sub, block_budget_bytes // max(itemsize, 1))

    # Lane-dense column tile, widened first.
    n_ceil = pl.cdiv(N, lane) * lane
    tn_cap = max(lane, ((budget_elems // sub) // lane) * lane)
    TN = min(n_ceil, tn_cap)
    if TN > N:
        TN = N  # full-extent block along N (always legal)

    # Row tile with the remaining budget.
    b_ceil = pl.cdiv(B, sub) * sub
    tb_cap = max(sub, ((budget_elems // max(TN, 1)) // sub) * sub)
    TB = min(b_ceil, tb_cap)
    if TB > B:
        TB = B  # full-extent block along B (always legal)

    return TB, TN


def bias_layer(x: jax.Array, bias: jax.Array) -> jax.Array:
    """Pallas implementation of BiasLayer.forward: x + bias (broadcast over batch)."""
    assert x.shape[1:] == bias.shape, (x.shape, bias.shape)
    B = x.shape[0]
    N = math.prod(x.shape[1:])

    out_dtype = jnp.result_type(x.dtype, bias.dtype)
    itemsize = jnp.dtype(out_dtype).itemsize

    # Lane-dense 2D views (layout plumbing only for contiguous arrays).
    x2 = x.reshape(B, N).astype(out_dtype)
    b2 = bias.reshape(1, N).astype(out_dtype)

    TB, TN = _choose_tiles(B, N, itemsize)
    # Batch-tile axis innermost so the bias block index is unchanged between
    # consecutive grid steps (bias stays resident per column tile).
    grid = (pl.cdiv(N, TN), pl.cdiv(B, TB))

    cost = pl.CostEstimate(
        flops=B * N,
        transcendentals=0,
        bytes_accessed=(2 * B * N + N) * itemsize,
    )

    out2 = pl.pallas_call(
        _bias_add_kernel,
        out_shape=jax.ShapeDtypeStruct((B, N), out_dtype),
        grid=grid,
        in_specs=[
            pl.BlockSpec((TB, TN), lambda j, i: (i, j)),
            # Depends only on the (outer) column-tile index -> fetched once per
            # column tile, resident across the inner batch-tile loop.
            pl.BlockSpec((1, TN), lambda j, i: (0, j)),
        ],
        out_specs=pl.BlockSpec((TB, TN), lambda j, i: (i, j)),
        compiler_params=pltpu.CompilerParams(
            dimension_semantics=("parallel", "parallel"),
        ),
        cost_estimate=cost,
    )(x2, b2)

    return out2.reshape(x.shape)


if __name__ == "__main__":
    key = jax.random.PRNGKey(0)
    kx, kb = jax.random.split(key)

    B, C, H, W = 2, 4, 16, 16
    x = jax.random.normal(kx, (B, C, H, W), dtype=jnp.float32)

    # nn.Parameter is initialized to zeros in the module; use a deterministic
    # nonzero bias here so the kernel is meaningfully exercised.
    bias = jax.random.normal(kb, (C, H, W), dtype=jnp.float32) * 0.1

    out = bias_layer(x, bias)
    out = jax.block_until_ready(out)

    ref = x + bias  # broadcast over batch, matches PyTorch x + self.bias
    assert out.shape == x.shape
    assert out.dtype == ref.dtype
    assert jnp.allclose(out, ref, atol=1e-6, rtol=1e-6)

    print("KERNEL_OK")
</pallas_src>

<mosaic_0001>
module attributes {stable_mosaic.version = 11 : i64} {
  func.func @_bias_add_kernel(%arg0: i32, %arg1: i32, %arg2: memref<2x1024xf32, #tpu.memory_space<vmem>>, %arg3: memref<1x1024xf32, #tpu.memory_space<vmem>>, %arg4: memref<2x1024xf32, #tpu.memory_space<vmem>>) attributes {dimension_semantics = [#tpu.dimension_semantics<parallel>, #tpu.dimension_semantics<parallel>], iteration_bounds = array<i64: 1, 1>, scalar_prefetch = 0 : i64, scratch_operands = 0 : i64, tpu.core_type = #tpu.core_type<tc>, window_params = [{transform_indices = @transform_0, window_bounds = array<i64: 2, 1024>}, {transform_indices = @transform_1, window_bounds = array<i64: 1, 1024>}, {transform_indices = @transform_2, window_bounds = array<i64: 2, 1024>}]} {
    %c0 = arith.constant 0 : index
    %c0_0 = arith.constant 0 : index
    %0 = vector.load %arg2[%c0, %c0_0] : memref<2x1024xf32, #tpu.memory_space<vmem>>, vector<2x1024xf32>
    %c0_1 = arith.constant 0 : index
    %c0_2 = arith.constant 0 : index
    %1 = vector.load %arg3[%c0_1, %c0_2] : memref<1x1024xf32, #tpu.memory_space<vmem>>, vector<1x1024xf32>
    %2 = vector.broadcast %1 : vector<1x1024xf32> to vector<2x1024xf32>
    %3 = arith.addf %0, %2 : vector<2x1024xf32>
    %c0_3 = arith.constant 0 : index
    %c0_4 = arith.constant 0 : index
    %4 = vector.load %arg4[%c0_3, %c0_4] : memref<2x1024xf32, #tpu.memory_space<vmem>>, vector<2x1024xf32>
    tpu.vector_store %arg4[%c0_3, %c0_4], %3 {strides = array<i32>} : memref<2x1024xf32, #tpu.memory_space<vmem>>, vector<2x1024xf32>,
    return
  }
  func.func @transform_0(%arg0: i32, %arg1: i32) -> (i32, i32) {
    %c0_i32 = arith.constant 0 : i32
    return %arg1, %arg0 : i32, i32
  }
  func.func @transform_1(%arg0: i32, %arg1: i32) -> (i32, i32) {
    %c0_i32 = arith.constant 0 : i32
    %c0_i32_0 = arith.constant 0 : i32
    return %c0_i32, %arg0 : i32, i32
  }
  func.func @transform_2(%arg0: i32, %arg1: i32) -> (i32, i32) {
    %c0_i32 = arith.constant 0 : i32
    return %arg1, %arg0 : i32, i32
  }
}

</mosaic_0001>

<llo_original>
// kernel: tpu_custom_call.1
$region0: #{tpu_custom_call.1}
  #allocation0 [shape = 'u32[]', space=smem, size = 0x4, offset = 0x4, fixed_abs, tag = 'smem constant byte address 0x4 - core index']
  #allocation1 [shape = 'u32[144,128]{1,0:T(1,128)}', space=vmem, size = 0x12000, scoped, tag = 'internal scratch']
  %s0 = inlined_call_operand.hbm [shape: f32[2,1024], index: 0, kind: input, shape index: {}]
  %s1 = inlined_call_operand.hbm [shape: f32[1,1024], index: 1, kind: input, shape index: {}]
  %s2 = inlined_call_operand.hbm [shape: f32[2,1024], index: 2, kind: output, shape index: {}]
  %s3 = sld [smem:[#allocation0]]
  $region26: #{tpu_custom_call.1} parent=0
    _
  %s5 = ssub.s32 1, %s3
  %s6 = scalar_select 0, %s5, %s3
  $region1: #{tpu_custom_call.1} parent=0
    #allocation2 [shape = 'u8[8192]{0}', space=vmem, size = 0x2000, scoped, tag = 'input window, operand 0, single buffered']
    #allocation3 [shape = 's32[1]{0}', space=sflag, size = 0x4, scoped, tag = 'scoped memory for tpu_custom_call.1']
    #allocation4 [shape = 's32[1]{0}', space=sflag, size = 0x4, scoped, tag = 'scoped memory for tpu_custom_call.1']
    #allocation5 [shape = 'u8[4096]{0}', space=vmem, size = 0x1000, scoped, tag = 'input window, operand 1, single buffered']
    #allocation6 [shape = 's32[1]{0}', space=sflag, size = 0x4, scoped, tag = 'scoped memory for tpu_custom_call.1']
    #allocation7 [shape = 'u8[8192]{0}', space=vmem, size = 0x2000, scoped, tag = 'output window, operand 0, single buffered']
    %7 = vsyncpa [#allocation3], 0
    %8 = vsyncpa [#allocation6], 0
    %9 = vsyncpa [#allocation4], 0
    // Predicated region
    $region2: #{tpu_custom_call.1} parent=1 // pred_check
      _
    $region3: #{tpu_custom_call.1} parent=1 // pred_check_branch
      %11 = sbr.rel (0) target = $region5
    $region4: #{tpu_custom_call.1} parent=1 // pred_region
      %s13 = ssub.s32 256, 256
      %14 = vsyncadd [#allocation3], %s13
      %s16 = sshll.u32 [#allocation2], 4
      %s17 = int_to_ptr.vmem [resolvable:$true] %s16
      %19 = dma.hbm_to_vmem [thread:$0]  %s0, 256, %s17, [#allocation3]
    $region5: #{tpu_custom_call.1} parent=1 // pred_fallthru
      _
    // Predicated region
    $region6: #{tpu_custom_call.1} parent=1 // pred_check
      _
    $region7: #{tpu_custom_call.1} parent=1 // pred_check_branch
      %21 = sbr.rel (0) target = $region9
    $region8: #{tpu_custom_call.1} parent=1 // pred_region
      %s23 = ssub.s32 128, 128
      %24 = vsyncadd [#allocation6], %s23
      %s26 = sshll.u32 [#allocation5], 4
      %s27 = int_to_ptr.vmem [resolvable:$true] %s26
      %29 = dma.hbm_to_vmem [thread:$0]  %s1, 128, %s27, [#allocation6]
    $region9: #{tpu_custom_call.1} parent=1 // pred_fallthru
      _
    // Predicated region
    $region10: #{tpu_custom_call.1} parent=1 // pred_check
      _
    $region11: #{tpu_custom_call.1} parent=1 // pred_check_branch
      %31 = sbr.rel (0) target = $region13
    $region12: #{tpu_custom_call.1} parent=1 // pred_region
      %32 = dma.done [#allocation3], 256
    $region13: #{tpu_custom_call.1} parent=1 // pred_fallthru
      _
    // Predicated region
    $region14: #{tpu_custom_call.1} parent=1 // pred_check
      _
    $region15: #{tpu_custom_call.1} parent=1 // pred_check_branch
      %34 = sbr.rel (0) target = $region17
    $region16: #{tpu_custom_call.1} parent=1 // pred_region
      %35 = dma.done [#allocation6], 128
    $region17: #{tpu_custom_call.1} parent=1 // pred_fallthru
      _
    %v36 = vld [vmem:[#allocation2] sm:$0xff]
    %v37 = vld [vmem:[#allocation2 + $0x8] sm:$0xff]
    %v38 = vld [vmem:[#allocation5] sm:$0xff]
    %v40 = vlaneseq
    %v41 = vshrl.u32 %v40, 7
    %v42 = vsub.s32 0, %v41
    %v43 = vrot.slane %v38, %v42
    %v44 = vlaneseq
    %v45 = vshrl.u32 %v44, 7
    %v46 = vsub.s32 1, %v45
    %v47 = vrot.slane %v38, %v46
    %v48 = vlaneseq
    %v49 = vshrl.u32 %v48, 7
    %v50 = vsub.s32 2, %v49
    %v51 = vrot.slane %v38, %v50
    %v52 = vlaneseq
    %v53 = vshrl.u32 %v52, 7
    %v54 = vsub.s32 3, %v53
    %v55 = vrot.slane %v38, %v54
    %v56 = vlaneseq
    %v57 = vshrl.u32 %v56, 7
    %v58 = vsub.s32 4, %v57
    %v59 = vrot.slane %v38, %v58
    %v60 = vlaneseq
    %v61 = vshrl.u32 %v60, 7
    %v62 = vsub.s32 5, %v61
    %v63 = vrot.slane %v38, %v62
    %v64 = vlaneseq
    %v65 = vshrl.u32 %v64, 7
    %v66 = vsub.s32 6, %v65
    %v67 = vrot.slane %v38, %v66
    %v68 = vlaneseq
    %v69 = vshrl.u32 %v68, 7
    %v70 = vsub.s32 7, %v69
    %v71 = vrot.slane %v38, %v70
    %v72 = vcombine.low %v43, %v47
    %v73 = vcombine.low %v51, %v55
    %v75 = vunpack.c.l.s4 1983009808
    %v76 = vunpack.c.0.s8 %v75
    %v77 = vlaneseq
    %v78 = vshrl.u32 %v77, 7
    %v79 = vsub.s32 %v76, %v78
    %v80 = vrot.slane %v72, %v79
    %v82 = vunpack.c.l.s4 1983009808
    %v83 = vunpack.c.0.s8 %v82
    %v84 = vlaneseq
    %v85 = vshrl.u32 %v84, 7
    %v86 = vsub.s32 %v83, %v85
    %v87 = vrot.slane %v73, %v86
    %v88 = vcombine.low %v80, %v87
    %v89 = vcombine.low %v59, %v63
    %v90 = vcombine.low %v67, %v71
    %v92 = vunpack.c.l.s4 1983009808
    %v93 = vunpack.c.0.s8 %v92
    %v94 = vlaneseq
    %v95 = vshrl.u32 %v94, 7
    %v96 = vsub.s32 %v93, %v95
    %v97 = vrot.slane %v89, %v96
    %v99 = vunpack.c.l.s4 1983009808
    %v100 = vunpack.c.0.s8 %v99
    %v101 = vlaneseq
    %v102 = vshrl.u32 %v101, 7
    %v103 = vsub.s32 %v100, %v102
    %v104 = vrot.slane %v90, %v103
    %v105 = vcombine.low %v97, %v104
    %v108 = vadd.f32 %v36, %v88
    %v109 = vadd.f32 %v37, %v105
    %110 = vst [vmem:[#allocation7] sm:$0xff] %v108
    %111 = vst [vmem:[#allocation7 + $0x8] sm:$0xff] %v109
    // Predicated region
    $region18: #{tpu_custom_call.1} parent=1 // pred_check
      _
    $region19: #{tpu_custom_call.1} parent=1 // pred_check_branch
      %113 = sbr.rel (0) target = $region21
    $region20: #{tpu_custom_call.1} parent=1 // pred_region
      %s115 = ssub.s32 256, 256
      %116 = vsyncadd [#allocation4], %s115
      %s118 = sshll.u32 [#allocation7], 4
      %s119 = int_to_ptr.vmem [resolvable:$true] %s118
      %121 = dma.vmem_to_hbm [thread:$0]  %s119, 256, %s2, [#allocation4]
    $region21: #{tpu_custom_call.1} parent=1 // pred_fallthru
      _
    // Predicated region
    $region22: #{tpu_custom_call.1} parent=1 // pred_check
      _
    $region23: #{tpu_custom_call.1} parent=1 // pred_check_branch
      %123 = sbr.rel (0) target = $region25
    $region24: #{tpu_custom_call.1} parent=1 // pred_region
      %124 = dma.done [#allocation4], 256
    $region25: #{tpu_custom_call.1} parent=1 // pred_fallthru
      _
    %125 = vsyncpa [#allocation3], 1
    %126 = vsyncpa [#allocation6], 1
    %127 = vsyncpa [#allocation4], 1

</llo_original>
